<compile_context>
chip_gen: v5e
topology: v5e:2x2
jax: 0.10.0
libtpu: 0.0.40
codegen_flags: <defaults>
</compile_context>

<pallas_src>
import jax
import jax.numpy as jnp
import numpy as np
from jax import lax
from jax.experimental import pallas as pl
from jax.experimental.pallas import tpu as pltpu

_SMOOTH = 1e-4
_NEG_PAD = -1e30        # 0.5*tanh(0.5*-1e30)+0.5 == 0.0 exactly in f32 / bf16
_LANE = 128
_MAX_TILE = 16384


def _round_up(x, m):
    return ((x + m - 1) // m) * m


def _num_tensorcores():
    """2 only on 2-TensorCore chips (v7x-class); v5e/v6e are single-core."""
    try:
        kind = jax.devices()[0].device_kind.lower()
    except Exception:
        return 1
    if "v7" in kind or "7x" in kind:
        return 2
    return 1


def _vmem_limits():
    """(vmem_limit_bytes, tiling_budget_bytes), derived from the chip."""
    cap = None
    try:
        cap = int(pltpu.get_tpu_info().vmem_capacity_bytes)
    except Exception:
        cap = None
    if cap is None:
        cap = 128 * 1024 * 1024
        try:
            kind = jax.devices()[0].device_kind.lower()
            if "v7" in kind or "7x" in kind:
                cap = 64 * 1024 * 1024       # v7x: 64 MiB per TensorCore
        except Exception:
            pass
    limit = min(cap // 2, 64 * 1024 * 1024)   # 64 MiB on 128-MiB chips, 32 on v7x
    budget = max(4 * 1024 * 1024, limit - 8 * 1024 * 1024)  # headroom for scratch
    return int(limit), int(budget)


def _choose_tiling(hw, num_parallel, n, c, logit_dtype, vmem_budget_bytes,
                   max_tile=_MAX_TILE):
    """Pick (tile, n_h, padded_len) for the flattened spatial axis."""
    itemsize = jnp.dtype(logit_dtype).itemsize
    pack = max(8, 32 // itemsize)             # sublane rows/vreg: 8 f32, 16 bf16
    per_part = max(1, -(-hw // num_parallel))
    c_pad = _round_up(c, pack)
    cm1_pad = _round_up(max(c - 1, 1), 8)
    # VMEM bytes per lane of the hw axis.
    per_lane = 2 * n * c_pad * itemsize       # logit block (double-buffered)
    per_lane += 2 * n * 8 * 4                 # target (N,1,tile) i32 (double-buffered)
    per_lane += 4 * n * cm1_pad * 4           # in-kernel f32 temporaries (prob, onehot, ...)
    budget_tile = max(_LANE, (vmem_budget_bytes // per_lane) // _LANE * _LANE)
    tile = min(max_tile, budget_tile, _round_up(per_part, _LANE))
    tile = max(tile, _LANE)
    n_h = -(-per_part // tile)
    padded = num_parallel * n_h * tile
    return tile, n_h, padded


def _make_dice_sums_kernel(num_classes):
    """Kernel accumulating per-class (intersection, sigmoid-sum, onehot-sum)."""
    cm1 = num_classes - 1

    def kernel(logit_ref, target_ref, inter_ref, psum_ref, tsum_ref):
        # logit_ref : (N, C, T)   input dtype (f32 or bf16)
        # target_ref: (N, 1, T)   int32 (padded lanes hold -1)
        # out refs  : (1, N, C-1, 1) f32, resident across the hw ("arbitrary") axis.
        @pl.when(pl.program_id(1) == 0)
        def _init():
            inter_ref[...] = jnp.zeros_like(inter_ref)
            psum_ref[...] = jnp.zeros_like(psum_ref)
            tsum_ref[...] = jnp.zeros_like(tsum_ref)

        # Foreground classes only: the background slab never hits the EUP.
        x = logit_ref[:, 1:, :].astype(jnp.float32)            # (N, C-1, T)
        # sigmoid(x) = 0.5*tanh(0.5*x) + 0.5  -> single EUP push per element.
        prob = 0.5 * jnp.tanh(0.5 * x) + 0.5
        cls = lax.broadcasted_iota(jnp.int32, (1, cm1, 1), 1) + 1
        onehot = (target_ref[...] == cls).astype(jnp.float32)   # (N, C-1, T)

        # Lane-axis reductions (keepdims keeps the natural sublane layout);
        # accumulate into tiny resident output blocks.
        inter_ref[0] += jnp.sum(prob * onehot, axis=-1, keepdims=True)
        psum_ref[0] += jnp.sum(prob, axis=-1, keepdims=True)
        tsum_ref[0] += jnp.sum(onehot, axis=-1, keepdims=True)

    return kernel


def batch_multiclass_sigmoid_dice_loss(logit, target, num_classes, weights=None,
                                       *, num_parallel=None):
    """JAX/Pallas equivalent of BatchMultiClassSigmoidDiceLoss.forward.

    Args:
      logit:  (N, C, H, W) float array (f32 or bf16), NCHW like PyTorch.
      target: (N, H, W) integer labels in [0, num_classes).
      num_classes: static class count C.
      weights: optional length-C per-class weights (indexed like the PyTorch
               module: weights[i] weights class i; class 0 is ignored).
      num_parallel: leading "parallel" grid splits; default is generation-aware
                    (2 on 2-TensorCore chips, else 1).

    Returns:
      scalar float32 loss.
    """
    logit = jnp.asarray(logit)
    target = jnp.asarray(target)
    N, C, H, W = logit.shape
    assert C == num_classes
    assert target.ndim == 3 and target.shape == (N, H, W)
    if num_classes < 2:
        return jnp.float32(0.0)
    if weights is not None:
        weights = jnp.asarray(weights, jnp.float32)
        assert weights.shape[0] == num_classes, (
            "weights must have length num_classes (indexed per class like the "
            "PyTorch module)")

    if not jnp.issubdtype(logit.dtype, jnp.floating):
        logit = logit.astype(jnp.float32)
    itemsize = jnp.dtype(logit.dtype).itemsize

    hw = H * W
    if num_parallel is None:
        num_parallel = _num_tensorcores()
    num_parallel = int(max(1, min(num_parallel, max(1, hw // _LANE))))

    vmem_limit, vmem_budget = _vmem_limits()
    tile, n_h, padded = _choose_tiling(hw, num_parallel, N, C, logit.dtype,
                                       vmem_budget)

    logit_flat = logit.reshape(N, C, hw)
    target_flat = target.astype(jnp.int32).reshape(N, 1, hw)
    if padded > hw:
        logit_flat = jnp.pad(logit_flat, ((0, 0), (0, 0), (0, padded - hw)),
                             constant_values=_NEG_PAD)
        target_flat = jnp.pad(target_flat, ((0, 0), (0, 0), (0, padded - hw)),
                              constant_values=-1)

    cm1 = num_classes - 1
    kernel = _make_dice_sums_kernel(num_classes)
    part_shape = jax.ShapeDtypeStruct((num_parallel, N, cm1, 1), jnp.float32)

    cost = pl.CostEstimate(
        flops=int(9 * N * cm1 * hw),
        transcendentals=int(N * cm1 * hw),
        bytes_accessed=int(N * C * padded * itemsize + N * padded * 4
                           + 3 * num_parallel * N * cm1 * 4),
    )

    inter_p, psum_p, tsum_p = pl.pallas_call(
        kernel,
        out_shape=(part_shape, part_shape, part_shape),
        grid_spec=pltpu.PrefetchScalarGridSpec(
            num_scalar_prefetch=0,
            grid=(num_parallel, n_h),
            in_specs=[
                pl.BlockSpec((N, C, tile), lambda p, h: (0, 0, p * n_h + h)),
                pl.BlockSpec((N, 1, tile), lambda p, h: (0, 0, p * n_h + h)),
            ],
            out_specs=(
                pl.BlockSpec((1, N, cm1, 1), lambda p, h: (p, 0, 0, 0)),
                pl.BlockSpec((1, N, cm1, 1), lambda p, h: (p, 0, 0, 0)),
                pl.BlockSpec((1, N, cm1, 1), lambda p, h: (p, 0, 0, 0)),
            ),
        ),
        compiler_params=pltpu.CompilerParams(
            dimension_semantics=("parallel", "arbitrary"),
            vmem_limit_bytes=vmem_limit,
        ),
        cost_estimate=cost,
    )(logit_flat, target_flat)

    # Tiny finalize in plain JAX: C-1 scalar dice ratios.
    inter = jnp.sum(inter_p, axis=(0, 1, 3))   # (C-1,)
    psum = jnp.sum(psum_p, axis=(0, 1, 3))
    tsum = jnp.sum(tsum_p, axis=(0, 1, 3))
    dice = (2.0 * inter + _SMOOTH) / (psum + tsum + _SMOOTH)
    per_class_loss = 1.0 - dice
    if weights is not None:
        per_class_loss = per_class_loss * weights[1:num_classes]
    return jnp.sum(per_class_loss)


def _reference_loss(logit, target, num_classes, weights=None):
    """Pure-JAX reference mirroring the PyTorch module exactly."""
    smooth = 1e-4
    logit = jax.nn.sigmoid(jnp.asarray(logit, jnp.float32))
    target_one_hot = jax.nn.one_hot(target, num_classes, dtype=jnp.float32)
    target_one_hot = jnp.transpose(target_one_hot, (0, 3, 1, 2))  # NCHW
    loss = 0.0
    for i in range(1, num_classes):
        lp = logit[:, i]
        tp = target_one_hot[:, i]
        inter = jnp.sum(lp * tp)
        dice = (2.0 * inter + smooth) / (jnp.sum(lp) + jnp.sum(tp) + smooth)
        d = 1.0 - dice
        if weights is not None:
            d = d * weights[i]
        loss = loss + d
    return loss


if __name__ == "__main__":
    # Deterministic synthetic inputs (the module has no learned parameters;
    # it is configured only by num_classes).
    num_classes = 4
    N, H, W = 2, 16, 16

    key = jax.random.PRNGKey(0)
    k1, k2, k3, k4 = jax.random.split(key, 4)
    logit = jax.random.normal(k1, (N, num_classes, H, W), dtype=jnp.float32)
    target = jax.random.randint(k2, (N, H, W), 0, num_classes, dtype=jnp.int32)

    loss = jax.block_until_ready(
        batch_multiclass_sigmoid_dice_loss(logit, target, num_classes))
    ref = jax.block_until_ready(_reference_loss(logit, target, num_classes))
    assert np.allclose(np.asarray(loss), np.asarray(ref), rtol=1e-4, atol=1e-5), (
        f"mismatch: pallas={loss} ref={ref}")

    # Exercise the spatial-padding path (H*W=169 pads to 256) and weights.
    H2 = W2 = 13
    logit2 = jax.random.normal(k3, (N, num_classes, H2, W2), dtype=jnp.float32)
    target2 = jax.random.randint(k4, (N, H2, W2), 0, num_classes, dtype=jnp.int32)
    weights = jnp.asarray([0.0, 1.0, 0.5, 2.0], jnp.float32)
    loss2 = jax.block_until_ready(
        batch_multiclass_sigmoid_dice_loss(logit2, target2, num_classes, weights))
    ref2 = jax.block_until_ready(
        _reference_loss(logit2, target2, num_classes, weights))
    assert np.all(np.isfinite(np.asarray(loss2))), f"non-finite loss: {loss2}"
    assert np.allclose(np.asarray(loss2), np.asarray(ref2), rtol=1e-4, atol=1e-5), (
        f"mismatch (padded case): pallas={loss2} ref={ref2}")

    print("KERNEL_OK")
</pallas_src>

<mosaic_0001>
module attributes {stable_mosaic.version = 11 : i64} {
  func.func @kernel(%arg0: i32, %arg1: i32, %arg2: memref<2x4x256xf32, #tpu.memory_space<vmem>>, %arg3: memref<2x1x256xi32, #tpu.memory_space<vmem>>, %arg4: memref<1x2x3x1xf32, #tpu.memory_space<vmem>>, %arg5: memref<1x2x3x1xf32, #tpu.memory_space<vmem>>, %arg6: memref<1x2x3x1xf32, #tpu.memory_space<vmem>>) attributes {dimension_semantics = [#tpu.dimension_semantics<parallel>, #tpu.dimension_semantics<arbitrary>], iteration_bounds = array<i64: 1, 1>, scalar_prefetch = 0 : i64, scratch_operands = 0 : i64, tpu.core_type = #tpu.core_type<tc>, window_params = [{transform_indices = @transform_0, window_bounds = array<i64: 2, 4, 256>}, {transform_indices = @transform_1, window_bounds = array<i64: 2, 1, 256>}, {transform_indices = @transform_2, window_bounds = array<i64: 1, 2, 3, 1>}, {transform_indices = @transform_3, window_bounds = array<i64: 1, 2, 3, 1>}, {transform_indices = @transform_4, window_bounds = array<i64: 1, 2, 3, 1>}]} {
    %c0_i32 = arith.constant 0 : i32
    %0 = arith.cmpi eq, %arg1, %c0_i32 : i32
    %1 = arith.extui %0 : i1 to i32
    %c0_i32_0 = arith.constant 0 : i32
    %2 = arith.cmpi ne, %1, %c0_i32_0 : i32
    scf.if %2 {
      %cst_34 = arith.constant 0.000000e+00 : f32
      %45 = vector.broadcast %cst_34 : f32 to vector<1x2x3x1xf32>
      %c0_35 = arith.constant 0 : index
      %c0_36 = arith.constant 0 : index
      %c0_37 = arith.constant 0 : index
      %c0_38 = arith.constant 0 : index
      %46 = vector.load %arg4[%c0_35, %c0_36, %c0_37, %c0_38] : memref<1x2x3x1xf32, #tpu.memory_space<vmem>>, vector<1x2x3x1xf32>
      tpu.vector_store %arg4[%c0_35, %c0_36, %c0_37, %c0_38], %45 {strides = array<i32>} : memref<1x2x3x1xf32, #tpu.memory_space<vmem>>, vector<1x2x3x1xf32>,
      %cst_39 = arith.constant 0.000000e+00 : f32
      %47 = vector.broadcast %cst_39 : f32 to vector<1x2x3x1xf32>
      %c0_40 = arith.constant 0 : index
      %c0_41 = arith.constant 0 : index
      %c0_42 = arith.constant 0 : index
      %c0_43 = arith.constant 0 : index
      %48 = vector.load %arg5[%c0_40, %c0_41, %c0_42, %c0_43] : memref<1x2x3x1xf32, #tpu.memory_space<vmem>>, vector<1x2x3x1xf32>
      tpu.vector_store %arg5[%c0_40, %c0_41, %c0_42, %c0_43], %47 {strides = array<i32>} : memref<1x2x3x1xf32, #tpu.memory_space<vmem>>, vector<1x2x3x1xf32>,
      %cst_44 = arith.constant 0.000000e+00 : f32
      %49 = vector.broadcast %cst_44 : f32 to vector<1x2x3x1xf32>
      %c0_45 = arith.constant 0 : index
      %c0_46 = arith.constant 0 : index
      %c0_47 = arith.constant 0 : index
      %c0_48 = arith.constant 0 : index
      %50 = vector.load %arg6[%c0_45, %c0_46, %c0_47, %c0_48] : memref<1x2x3x1xf32, #tpu.memory_space<vmem>>, vector<1x2x3x1xf32>
      tpu.vector_store %arg6[%c0_45, %c0_46, %c0_47, %c0_48], %49 {strides = array<i32>} : memref<1x2x3x1xf32, #tpu.memory_space<vmem>>, vector<1x2x3x1xf32>,
    } else {
    }
    %c0 = arith.constant 0 : index
    %c1 = arith.constant 1 : index
    %c0_1 = arith.constant 0 : index
    %3 = vector.load %arg2[%c0, %c1, %c0_1] : memref<2x4x256xf32, #tpu.memory_space<vmem>>, vector<2x3x256xf32>
    %cst = arith.constant 5.000000e-01 : f32
    %4 = vector.broadcast %cst : f32 to vector<2x3x256xf32>
    %5 = arith.mulf %4, %3 : vector<2x3x256xf32>
    %6 = math.tanh %5 : vector<2x3x256xf32>
    %cst_2 = arith.constant 5.000000e-01 : f32
    %7 = vector.broadcast %cst_2 : f32 to vector<2x3x256xf32>
    %8 = arith.mulf %7, %6 : vector<2x3x256xf32>
    %cst_3 = arith.constant 5.000000e-01 : f32
    %9 = vector.broadcast %cst_3 : f32 to vector<2x3x256xf32>
    %10 = arith.addf %8, %9 : vector<2x3x256xf32>
    %11 = tpu.iota {dimensions = array<i32: 1>} : vector<1x3x1xi32>
    %c1_i32 = arith.constant 1 : i32
    %12 = vector.broadcast %c1_i32 : i32 to vector<1x3x1xi32>
    %13 = arith.addi %11, %12 : vector<1x3x1xi32>
    %c0_4 = arith.constant 0 : index
    %c0_5 = arith.constant 0 : index
    %c0_6 = arith.constant 0 : index
    %14 = vector.load %arg3[%c0_4, %c0_5, %c0_6] : memref<2x1x256xi32, #tpu.memory_space<vmem>>, vector<2x1x256xi32>
    %15 = vector.broadcast %14 : vector<2x1x256xi32> to vector<2x3x256xi32>
    %16 = vector.broadcast %13 : vector<1x3x1xi32> to vector<2x3x256xi32>
    %17 = arith.cmpi eq, %15, %16 : vector<2x3x256xi32>
    %18 = arith.extui %17 : vector<2x3x256xi1> to vector<2x3x256xi32>
    %19 = arith.sitofp %18 : vector<2x3x256xi32> to vector<2x3x256xf32>
    %c0_7 = arith.constant 0 : index
    %c0_8 = arith.constant 0 : index
    %c0_9 = arith.constant 0 : index
    %c0_10 = arith.constant 0 : index
    %20 = vector.load %arg4[%c0_7, %c0_8, %c0_9, %c0_10] : memref<1x2x3x1xf32, #tpu.memory_space<vmem>>, vector<1x2x3x1xf32>
    %21 = vector.shape_cast %20 : vector<1x2x3x1xf32> to vector<2x3x1xf32>
    %22 = arith.mulf %10, %19 : vector<2x3x256xf32>
    %cst_11 = arith.constant dense<0.000000e+00> : vector<2x3xf32>
    %23 = vector.multi_reduction <add>, %22, %cst_11 [2] : vector<2x3x256xf32> to vector<2x3xf32>
    %24 = vector.shape_cast %23 : vector<2x3xf32> to vector<2x3x1xf32>
    %25 = arith.addf %21, %24 : vector<2x3x1xf32>
    %c0_12 = arith.constant 0 : index
    %c0_13 = arith.constant 0 : index
    %c0_14 = arith.constant 0 : index
    %c0_15 = arith.constant 0 : index
    %26 = vector.load %arg4[%c0_12, %c0_13, %c0_14, %c0_15] : memref<1x2x3x1xf32, #tpu.memory_space<vmem>>, vector<1x2x3x1xf32>
    %27 = vector.shape_cast %26 : vector<1x2x3x1xf32> to vector<2x3x1xf32>
    %28 = vector.shape_cast %25 : vector<2x3x1xf32> to vector<1x2x3x1xf32>
    tpu.vector_store %arg4[%c0_12, %c0_13, %c0_14, %c0_15], %28 {strides = array<i32>} : memref<1x2x3x1xf32, #tpu.memory_space<vmem>>, vector<1x2x3x1xf32>,
    %c0_16 = arith.constant 0 : index
    %c0_17 = arith.constant 0 : index
    %c0_18 = arith.constant 0 : index
    %c0_19 = arith.constant 0 : index
    %29 = vector.load %arg5[%c0_16, %c0_17, %c0_18, %c0_19] : memref<1x2x3x1xf32, #tpu.memory_space<vmem>>, vector<1x2x3x1xf32>
    %30 = vector.shape_cast %29 : vector<1x2x3x1xf32> to vector<2x3x1xf32>
    %cst_20 = arith.constant dense<0.000000e+00> : vector<2x3xf32>
    %31 = vector.multi_reduction <add>, %10, %cst_20 [2] : vector<2x3x256xf32> to vector<2x3xf32>
    %32 = vector.shape_cast %31 : vector<2x3xf32> to vector<2x3x1xf32>
    %33 = arith.addf %30, %32 : vector<2x3x1xf32>
    %c0_21 = arith.constant 0 : index
    %c0_22 = arith.constant 0 : index
    %c0_23 = arith.constant 0 : index
    %c0_24 = arith.constant 0 : index
    %34 = vector.load %arg5[%c0_21, %c0_22, %c0_23, %c0_24] : memref<1x2x3x1xf32, #tpu.memory_space<vmem>>, vector<1x2x3x1xf32>
    %35 = vector.shape_cast %34 : vector<1x2x3x1xf32> to vector<2x3x1xf32>
    %36 = vector.shape_cast %33 : vector<2x3x1xf32> to vector<1x2x3x1xf32>
    tpu.vector_store %arg5[%c0_21, %c0_22, %c0_23, %c0_24], %36 {strides = array<i32>} : memref<1x2x3x1xf32, #tpu.memory_space<vmem>>, vector<1x2x3x1xf32>,
    %c0_25 = arith.constant 0 : index
    %c0_26 = arith.constant 0 : index
    %c0_27 = arith.constant 0 : index
    %c0_28 = arith.constant 0 : index
    %37 = vector.load %arg6[%c0_25, %c0_26, %c0_27, %c0_28] : memref<1x2x3x1xf32, #tpu.memory_space<vmem>>, vector<1x2x3x1xf32>
    %38 = vector.shape_cast %37 : vector<1x2x3x1xf32> to vector<2x3x1xf32>
    %cst_29 = arith.constant dense<0.000000e+00> : vector<2x3xf32>
    %39 = vector.multi_reduction <add>, %19, %cst_29 [2] : vector<2x3x256xf32> to vector<2x3xf32>
    %40 = vector.shape_cast %39 : vector<2x3xf32> to vector<2x3x1xf32>
    %41 = arith.addf %38, %40 : vector<2x3x1xf32>
    %c0_30 = arith.constant 0 : index
    %c0_31 = arith.constant 0 : index
    %c0_32 = arith.constant 0 : index
    %c0_33 = arith.constant 0 : index
    %42 = vector.load %arg6[%c0_30, %c0_31, %c0_32, %c0_33] : memref<1x2x3x1xf32, #tpu.memory_space<vmem>>, vector<1x2x3x1xf32>
    %43 = vector.shape_cast %42 : vector<1x2x3x1xf32> to vector<2x3x1xf32>
    %44 = vector.shape_cast %41 : vector<2x3x1xf32> to vector<1x2x3x1xf32>
    tpu.vector_store %arg6[%c0_30, %c0_31, %c0_32, %c0_33], %44 {strides = array<i32>} : memref<1x2x3x1xf32, #tpu.memory_space<vmem>>, vector<1x2x3x1xf32>,
    return
  }
  func.func @transform_0(%arg0: i32, %arg1: i32) -> (i32, i32, i32) {
    %c1_i32 = arith.constant 1 : i32
    %0 = arith.muli %arg0, %c1_i32 : i32
    %1 = arith.addi %0, %arg1 : i32
    %c0_i32 = arith.constant 0 : i32
    %c0_i32_0 = arith.constant 0 : i32
    %c0_i32_1 = arith.constant 0 : i32
    return %c0_i32, %c0_i32_0, %1 : i32, i32, i32
  }
  func.func @transform_1(%arg0: i32, %arg1: i32) -> (i32, i32, i32) {
    %c1_i32 = arith.constant 1 : i32
    %0 = arith.muli %arg0, %c1_i32 : i32
    %1 = arith.addi %0, %arg1 : i32
    %c0_i32 = arith.constant 0 : i32
    %c0_i32_0 = arith.constant 0 : i32
    %c0_i32_1 = arith.constant 0 : i32
    return %c0_i32, %c0_i32_0, %1 : i32, i32, i32
  }
  func.func @transform_2(%arg0: i32, %arg1: i32) -> (i32, i32, i32, i32) {
    %c0_i32 = arith.constant 0 : i32
    %c0_i32_0 = arith.constant 0 : i32
    %c0_i32_1 = arith.constant 0 : i32
    %c0_i32_2 = arith.constant 0 : i32
    return %arg0, %c0_i32, %c0_i32_0, %c0_i32_1 : i32, i32, i32, i32
  }
  func.func @transform_3(%arg0: i32, %arg1: i32) -> (i32, i32, i32, i32) {
    %c0_i32 = arith.constant 0 : i32
    %c0_i32_0 = arith.constant 0 : i32
    %c0_i32_1 = arith.constant 0 : i32
    %c0_i32_2 = arith.constant 0 : i32
    return %arg0, %c0_i32, %c0_i32_0, %c0_i32_1 : i32, i32, i32, i32
  }
  func.func @transform_4(%arg0: i32, %arg1: i32) -> (i32, i32, i32, i32) {
    %c0_i32 = arith.constant 0 : i32
    %c0_i32_0 = arith.constant 0 : i32
    %c0_i32_1 = arith.constant 0 : i32
    %c0_i32_2 = arith.constant 0 : i32
    return %arg0, %c0_i32, %c0_i32_0, %c0_i32_1 : i32, i32, i32, i32
  }
}

</mosaic_0001>

<llo_original>
// kernel: tpu_custom_call.1
$region0: #{tpu_custom_call.1}
  #allocation0 [shape = 'u32[]', space=smem, size = 0x4, offset = 0x4, fixed_abs, tag = 'smem constant byte address 0x4 - core index']
  #allocation1 [shape = 'u32[72,128]{1,0:T(1,128)}', space=vmem, size = 0x9000, scoped, tag = 'internal scratch']
  %s0 = inlined_call_operand.hbm [shape: f32[2,4,256], index: 0, kind: input, shape index: {}]
  %s1 = inlined_call_operand.hbm [shape: s32[2,1,256], index: 1, kind: input, shape index: {}]
  %s2 = inlined_call_operand.vmem [shape: f32[1,2,3,1], index: 2, kind: output, shape index: {0}]
  %s3 = inlined_call_operand.vmem [shape: f32[1,2,3,1], index: 3, kind: output, shape index: {1}]
  %s4 = inlined_call_operand.vmem [shape: f32[1,2,3,1], index: 4, kind: output, shape index: {2}]
  %5 = xla_tuple %s2, %s3, %s4
  %s6 = sld [smem:[#allocation0]]
  $region46: #{tpu_custom_call.1} parent=0
    _
  %s8 = ssub.s32 1, %s6
  %s9 = scalar_select 0, %s8, %s6
  $region1: #{tpu_custom_call.1} parent=0
    #allocation2 [shape = 'u8[8192]{0}', space=vmem, size = 0x2000, scoped, tag = 'input window, operand 0, single buffered']
    #allocation3 [shape = 's32[1]{0}', space=sflag, size = 0x4, scoped, tag = 'scoped memory for tpu_custom_call.1']
    #allocation4 [shape = 'u8[2048]{0}', space=vmem, size = 0x800, scoped, tag = 'input window, operand 1, single buffered']
    #allocation5 [shape = 's32[1]{0}', space=sflag, size = 0x4, scoped, tag = 'scoped memory for tpu_custom_call.1']
    %10 = vsyncpa [#allocation3], 0
    %11 = vsyncpa [#allocation5], 0
    // Predicated region
    $region2: #{tpu_custom_call.1} parent=1 // pred_check
      _
    $region3: #{tpu_custom_call.1} parent=1 // pred_check_branch
      %13 = sbr.rel (0) target = $region5
    $region4: #{tpu_custom_call.1} parent=1 // pred_region
      %s14 = sadd.s32 0, 0
      %s15 = smul.u32 2, %s14
      %17 = vsyncadd [#allocation3], 0
      %s18 = smul.addr %s15, 4
      %s19 = scalar_lea.hbm %s0, %s18
      %s20 = sshll.u32 %s19, 4
      %s21 = int_to_ptr.hbm [resolvable:$true] %s20
      %s22 = sshll.u32 [#allocation2], 4
      %s23 = int_to_ptr.vmem [resolvable:$true] %s22
      %28 = dma.hbm_to_vmem [thread:$0]  %s21, 256, %s23, [#allocation3], 128, 128, 8
    $region5: #{tpu_custom_call.1} parent=1 // pred_fallthru
      _
    // Predicated region
    $region6: #{tpu_custom_call.1} parent=1 // pred_check
      _
    $region7: #{tpu_custom_call.1} parent=1 // pred_check_branch
      %30 = sbr.rel (0) target = $region9
    $region8: #{tpu_custom_call.1} parent=1 // pred_region
      %s31 = sadd.s32 0, 0
      %s32 = smul.u32 2, %s31
      %34 = vsyncadd [#allocation5], 0
      %s35 = scalar_lea.hbm %s1, %s32
      %s36 = sshll.u32 %s35, 4
      %s37 = int_to_ptr.hbm [resolvable:$true] %s36
      %s38 = sshll.u32 [#allocation4], 4
      %s39 = int_to_ptr.vmem [resolvable:$true] %s38
      %44 = dma.hbm_to_vmem [thread:$0]  %s37, 64, %s39, [#allocation5], 32, 32, 2
    $region9: #{tpu_custom_call.1} parent=1 // pred_fallthru
      _
    // Predicated region
    $region10: #{tpu_custom_call.1} parent=1 // pred_check
      _
    $region11: #{tpu_custom_call.1} parent=1 // pred_check_branch
      %46 = sbr.rel (0) target = $region13
    $region12: #{tpu_custom_call.1} parent=1 // pred_region
      %48 = dma.done [#allocation3], 256
    $region13: #{tpu_custom_call.1} parent=1 // pred_fallthru
      _
    // Predicated region
    $region14: #{tpu_custom_call.1} parent=1 // pred_check
      _
    $region15: #{tpu_custom_call.1} parent=1 // pred_check_branch
      %50 = sbr.rel (0) target = $region17
    $region16: #{tpu_custom_call.1} parent=1 // pred_region
      %52 = dma.done [#allocation5], 64
    $region17: #{tpu_custom_call.1} parent=1 // pred_fallthru
      _
    %s53 = sadd.s32 0, 0
    %s54 = smul.u32 2, %s53
    %s55 = sadd.s32 0, 0
    %s56 = smul.u32 2, %s55
    %p57 = scmp.eq.s32.totalorder 0, 0
    // Predicated region
    $region18: #{tpu_custom_call.1} parent=1 // pred_check
      %p58 = pneg %p57
    $region19: #{tpu_custom_call.1} parent=1 // pred_check_branch
      %60 = sbr.rel (%p58) target = $region21
    $region20: #{tpu_custom_call.1} parent=1 // pred_region
      %vm61 = vcmask 2048
      %62 = vst.msk [vmem:[%s2] sm:$0x7] %vm61, 0.0
      %63 = vst.msk [vmem:[%s2 + $0x4] sm:$0x7] %vm61, 0.0
      %64 = vst.msk [vmem:[%s3] sm:$0x7] %vm61, 0.0
      %65 = vst.msk [vmem:[%s3 + $0x4] sm:$0x7] %vm61, 0.0
      %66 = vst.msk [vmem:[%s4] sm:$0x7] %vm61, 0.0
      %67 = vst.msk [vmem:[%s4 + $0x4] sm:$0x7] %vm61, 0.0
    $region21: #{tpu_custom_call.1} parent=1 // pred_fallthru
      _
    %v68 = vld [vmem:[#allocation2] sm:$0xee]
    %v69 = vld [vmem:[#allocation2 + $0x8] sm:$0xee]
    %v70 = vmul.f32 %v68, 0.5
    %v71 = vmul.f32 %v69, 0.5
    %v72 = vtanh.pop %v70
    %v73 = vtanh.pop %v71
    %v74 = vmul.f32 %v72, 0.5
    %v75 = vmul.f32 %v73, 0.5
    %v76 = vadd.f32 %v74, 0.5
    %v77 = vadd.f32 %v75, 0.5
    %v78 = vlaneseq
    %v79 = vshrl.u32 %v78, 7
    %v80 = vadd.s32 %v79, 1
    %v81 = vld [vmem:[#allocation4] sm:$0x3]
    %v82 = vld [vmem:[#allocation4 + $0x2] sm:$0x3]
    %v83 = vperm.slane %v81, 0
    %v84 = vperm.slane %v81, 1
    %v85 = vperm.slane %v82, 0
    %v86 = vperm.slane %v82, 1
    %vm87 = vcmp.eq.s32.totalorder %v83, %v80
    %vm88 = vcmp.eq.s32.totalorder %v84, %v80
    %vm89 = vcmp.eq.s32.totalorder %v85, %v80
    %vm90 = vcmp.eq.s32.totalorder %v86, %v80
    %v91 = vsel %vm87, 1, 0
    %v92 = vsel %vm88, 1, 0
    %v93 = vsel %vm89, 1, 0
    %v94 = vsel %vm90, 1, 0
    %v95 = vcvt.s32.f32 %v91
    %v96 = vcvt.s32.f32 %v92
    %v97 = vcvt.s32.f32 %v93
    %v98 = vcvt.s32.f32 %v94
    %v99 = vld [vmem:[%s2] sm:$0x7]
    %v100 = vld [vmem:[%s2 + $0x4] sm:$0x7]
    %v105 = vrot.slane %v96, 4
    %v106 = vrot.slane %v98, 4
    %vm107 = vcmask 1043456
    %v108 = vsel %vm107, %v95, %v105
    %v109 = vsel %vm107, %v97, %v106
    %v110 = vrot.slane %v108, 7
    %v111 = vrot.slane %v109, 7
    %v114 = vmul.f32 %v76, %v110
    %v115 = vmul.f32 %v77, %v111
    %118 = vst [vmem:[#allocation1] ss:$2 sm:$0xff] %v114
    %v119 = vld.sshfl [vmem:[#allocation1] sm:$0xff pattern:$0x75316420]
    %v120 = vld.sshfl [vmem:[#allocation1 + $0x8] sm:$0xff pattern:$0x75316420]
    %s121 = scalar_lea.vmem [#allocation1], 16
    %122 = vst [vmem:[%s121] ss:$2 sm:$0xff] %v115
    %v123 = vld.sshfl [vmem:[#allocation1 + $0x10] sm:$0xff pattern:$0x75316420]
    %v124 = vld.sshfl [vmem:[#allocation1 + $0x18] sm:$0xff pattern:$0x75316420]
    %vm129 = vcmask 1043457
    %v130 = vsel %vm129, %v119, 0.0
    %v131 = vsel %vm129, %v120, 0.0
    %v132 = vadd.f32 %v130, %v131
    %133 = vadd.xlane.f32.xlu0 %v132
    %v134 = vpop.xlane.xlu0 %133
    %v135 = vsel %vm129, %v123, 0.0
    %v136 = vsel %vm129, %v124, 0.0
    %v137 = vadd.f32 %v135, %v136
    %138 = vadd.xlane.f32.xlu0 %v137
    %v139 = vpop.xlane.xlu0 %138
    %v142 = vrot.slane %v134, 1
    %v143 = vrot.slane %v139, 1
    %v146 = vadd.f32 %v99, %v142
    %v147 = vadd.f32 %v100, %v143
    %vm148 = vcmask 2048
    %149 = vst.msk [vmem:[%s2] sm:$0x7] %vm148, %v146
    %150 = vst.msk [vmem:[%s2 + $0x4] sm:$0x7] %vm148, %v147
    %v151 = vld [vmem:[%s3] sm:$0x7]
    %v152 = vld [vmem:[%s3 + $0x4] sm:$0x7]
    %155 = vst [vmem:[#allocation1] ss:$2 sm:$0xff] %v76
    %v156 = vld.sshfl [vmem:[#allocation1] sm:$0xff pattern:$0x75316420]
    %v157 = vld.sshfl [vmem:[#allocation1 + $0x8] sm:$0xff pattern:$0x75316420]
    %s158 = scalar_lea.vmem [#allocation1], 16
    %159 = vst [vmem:[%s158] ss:$2 sm:$0xff] %v77
    %v160 = vld.sshfl [vmem:[#allocation1 + $0x10] sm:$0xff pattern:$0x75316420]
    %v161 = vld.sshfl [vmem:[#allocation1 + $0x18] sm:$0xff pattern:$0x75316420]
    %v166 = vsel %vm129, %v156, 0.0
    %v167 = vsel %vm129, %v157, 0.0
    %v168 = vadd.f32 %v166, %v167
    %169 = vadd.xlane.f32.xlu0 %v168
    %v170 = vpop.xlane.xlu0 %169
    %v171 = vsel %vm129, %v160, 0.0
    %v172 = vsel %vm129, %v161, 0.0
    %v173 = vadd.f32 %v171, %v172
    %174 = vadd.xlane.f32.xlu0 %v173
    %v175 = vpop.xlane.xlu0 %174
    %v178 = vrot.slane %v170, 1
    %v179 = vrot.slane %v175, 1
    %v182 = vadd.f32 %v151, %v178
    %v183 = vadd.f32 %v152, %v179
    %184 = vst.msk [vmem:[%s3] sm:$0x7] %vm148, %v182
    %185 = vst.msk [vmem:[%s3 + $0x4] sm:$0x7] %vm148, %v183
    %v186 = vld [vmem:[%s4] sm:$0x7]
    %v187 = vld [vmem:[%s4 + $0x4] sm:$0x7]
    %vm188 = vcmask 1042432
    %v189 = vsel %vm188, %v95, 0.0
    %v190 = vsel %vm188, %v96, 0.0
    %v191 = vadd.f32 %v189, %v190
    %192 = vadd.xlane.f32.xlu0 %v191
    %v193 = vpop.xlane.xlu0 %192
    %v194 = vsel %vm188, %v97, 0.0
    %v195 = vsel %vm188, %v98, 0.0
    %v196 = vadd.f32 %v194, %v195
    %197 = vadd.xlane.f32.xlu0 %v196
    %v198 = vpop.xlane.xlu0 %197
    %v199 = vadd.f32 %v186, %v193
    %v200 = vadd.f32 %v187, %v198
    %201 = vst.msk [vmem:[%s4] sm:$0x7] %vm148, %v199
    %202 = vst.msk [vmem:[%s4 + $0x4] sm:$0x7] %vm148, %v200
    // Predicated region
    $region22: #{tpu_custom_call.1} parent=1 // pred_check
      _
    $region23: #{tpu_custom_call.1} parent=1 // pred_check_branch
      %204 = sbr.rel (0) target = $region25
    $region24: #{tpu_custom_call.1} parent=1 // pred_region
      _
    $region25: #{tpu_custom_call.1} parent=1 // pred_fallthru
      _
    // Predicated region
    $region26: #{tpu_custom_call.1} parent=1 // pred_check
      _
    $region27: #{tpu_custom_call.1} parent=1 // pred_check_branch
      %206 = sbr.rel (0) target = $region29
    $region28: #{tpu_custom_call.1} parent=1 // pred_region
      _
    $region29: #{tpu_custom_call.1} parent=1 // pred_fallthru
      _
    // Predicated region
    $region30: #{tpu_custom_call.1} parent=1 // pred_check
      _
    $region31: #{tpu_custom_call.1} parent=1 // pred_check_branch
      %208 = sbr.rel (0) target = $region33
    $region32: #{tpu_custom_call.1} parent=1 // pred_region
      _
    $region33: #{tpu_custom_call.1} parent=1 // pred_fallthru
      _
    // Predicated region
    $region34: #{tpu_custom_call.1} parent=1 // pred_check
      _
    $region35: #{tpu_custom_call.1} parent=1 // pred_check_branch
      %210 = sbr.rel (0) target = $region37
    $region36: #{tpu_custom_call.1} parent=1 // pred_region
      _
    $region37: #{tpu_custom_call.1} parent=1 // pred_fallthru
      _
    // Predicated region
    $region38: #{tpu_custom_call.1} parent=1 // pred_check
      _
    $region39: #{tpu_custom_call.1} parent=1 // pred_check_branch
      %212 = sbr.rel (0) target = $region41
    $region40: #{tpu_custom_call.1} parent=1 // pred_region
      _
    $region41: #{tpu_custom_call.1} parent=1 // pred_fallthru
      _
    // Predicated region
    $region42: #{tpu_custom_call.1} parent=1 // pred_check
      _
    $region43: #{tpu_custom_call.1} parent=1 // pred_check_branch
      %214 = sbr.rel (0) target = $region45
    $region44: #{tpu_custom_call.1} parent=1 // pred_region
      _
    $region45: #{tpu_custom_call.1} parent=1 // pred_fallthru
      _
    %215 = vsyncpa [#allocation3], 1
    %216 = vsyncpa [#allocation5], 1

</llo_original>
